<compile_context>
chip_gen: v6e
topology: v6e:2x2x1
jax: 0.10.0
libtpu: 0.0.40
codegen_flags: <defaults>
</compile_context>

<pallas_src>
import functools

import jax
import jax.numpy as jnp
from jax import lax
from jax.experimental import pallas as pl
from jax.experimental.pallas import tpu as pltpu


def _round_up(x, m):
    return -(-x // m) * m


def _vmem_capacity_bytes():
    # Generation-aware physical VMEM: 128 MiB on v5e/v6e, 64 MiB per TC on v7x.
    try:
        info = pltpu.get_tpu_info()
        cap = getattr(info, "vmem_capacity_bytes", None)
        if cap:
            return int(cap)
    except Exception:
        pass
    return 64 * 2**20  # conservative default (v7x per-TensorCore)


def _ffn_kernel(x_ref, w1_ref, b1_ref, w2_ref, b2_ref, gamma_ref, beta_ref,
                out_ref, acc_ref, *, eps, matmul_dtype, inv_d_model):
    # Grid = (row_tiles, ff_tiles); the ff (d_ff) axis is the reduction axis.
    j = pl.program_id(1)

    # Initialize the accumulator with the broadcast ff2 bias so the epilogue
    # needs no separate +b2 pass.
    @pl.when(j == 0)
    def _():
        acc_ref[...] = jnp.broadcast_to(
            b2_ref[...].astype(jnp.float32), acc_ref.shape)

    x = x_ref[...]                                    # (tm, d_model), x.dtype
    xm = x.astype(matmul_dtype)

    # h_j = relu(x @ W1[:, j_block] + b1[j_block])  — f32 MXU accumulation.
    # Weights are already in matmul_dtype (pre-cast in the wrapper).
    h = jnp.dot(xm, w1_ref[...], preferred_element_type=jnp.float32)
    h = jnp.maximum(h + b1_ref[...].astype(jnp.float32), 0.0)

    # acc += h_j @ W2[j_block, :]
    acc_ref[...] += jnp.dot(h.astype(matmul_dtype), w2_ref[...],
                            preferred_element_type=jnp.float32)

    @pl.when(j == pl.num_programs(1) - 1)
    def _():
        r = x.astype(jnp.float32) + acc_ref[...]      # residual (+b2 in acc)
        # One-pass LayerNorm statistics.
        s = jnp.sum(r, axis=-1, keepdims=True)
        ss = jnp.sum(r * r, axis=-1, keepdims=True)
        mean = s * inv_d_model
        var = jnp.maximum(ss * inv_d_model - mean * mean, 0.0)
        inv = lax.rsqrt(var + eps)                    # EUP slot, ~free
        out = (r - mean) * inv * gamma_ref[...].astype(jnp.float32) \
              + beta_ref[...].astype(jnp.float32)
        out_ref[...] = out.astype(out_ref.dtype)


def feed_forward_network(x, w1, b1, w2, b2, gamma, beta, *,
                         eps=1e-5, block_rows=512, block_ff=512,
                         matmul_dtype=jnp.bfloat16):
    """x: [..., d_model]; w1: [d_model, d_ff]; w2: [d_ff, d_model];
    b1: [d_ff]; b2/gamma/beta: [d_model].  Weights are in (in, out) layout
    (already transposed relative to PyTorch nn.Linear storage).

    matmul_dtype=bf16 (default): bf16 MXU operands with f32 accumulation —
    the fast path on all TPU generations.  Pass jnp.float32 for a tighter
    (slower, multi-pass MXU) numerical path."""
    orig_shape = x.shape
    d_model = orig_shape[-1]
    d_ff = w1.shape[1]
    assert w1.shape == (d_model, d_ff)
    assert w2.shape == (d_ff, d_model)

    matmul_dtype = jnp.dtype(matmul_dtype)

    # Pre-cast the weights (the dominant HBM stream) in the wrapper; the
    # activations stay in x.dtype (needed at full precision for residual /
    # LayerNorm) and are cast per-tile inside the kernel.
    w1m = w1.astype(matmul_dtype)
    w2m = w2.astype(matmul_dtype)

    x2 = x.reshape(-1, d_model)
    n = x2.shape[0]

    x_itemsize = jnp.dtype(x.dtype).itemsize
    w_itemsize = matmul_dtype.itemsize

    cap = _vmem_capacity_bytes()
    budget = int(cap * 0.75)          # leave headroom for Mosaic scratch

    def footprint(tm, tf):
        return (2 * tm * d_model * x_itemsize           # x block (double-buf)
                + 2 * tm * d_model * x_itemsize         # out block
                + 2 * d_model * tf * w_itemsize         # w1 block
                + 2 * tf * d_model * w_itemsize         # w2 block
                + 2 * (tf + 3 * d_model) * 4            # biases / gamma / beta
                + tm * d_model * 4)                     # f32 accumulator

    # Row tiling (parallel axis): big tiles amortize weight streaming.
    tm = min(block_rows, _round_up(n, 8))

    # d_ff tiling (reduction axis).  Prefer keeping the full W1/W2 resident
    # in VMEM (constant index_map -> DMA'd once, reused across all row
    # tiles); otherwise tile d_ff in 128-multiples and shrink until the
    # double-buffered footprint fits the budget.
    tf_full = _round_up(d_ff, 128)
    if footprint(tm, tf_full) <= budget:
        tf = tf_full
    else:
        tf = _round_up(min(block_ff, tf_full), 128)
        while footprint(tm, tf) > budget and tm > 128:
            tm = max(128, _round_up(tm // 2, 8))
        while footprint(tm, tf) > budget and tf > 128:
            tf = max(128, _round_up(tf // 2, 128))
        while footprint(tm, tf) > budget and tm > 8:
            tm = max(8, _round_up(tm // 2, 8))

    # Pad d_ff to a multiple of tf.  Zero padding is exact: relu(x@0 + 0)=0
    # and the padded rows of W2 are zero, so padded columns contribute 0.
    d_ff_p = _round_up(d_ff, tf)
    if d_ff_p != d_ff:
        w1m = jnp.pad(w1m, ((0, 0), (0, d_ff_p - d_ff)))
        w2m = jnp.pad(w2m, ((0, d_ff_p - d_ff), (0, 0)))
        b1 = jnp.pad(b1, ((0, d_ff_p - d_ff),))

    # Pad rows to a multiple of the row tile (padded rows are sliced off).
    n_pad = _round_up(n, tm)
    if n_pad != n:
        x2 = jnp.pad(x2, ((0, n_pad - n), (0, 0)))

    grid = (n_pad // tm, d_ff_p // tf)

    b1_2 = b1.reshape(1, d_ff_p)
    b2_2 = b2.reshape(1, d_model)
    gamma_2 = gamma.reshape(1, d_model)
    beta_2 = beta.reshape(1, d_model)

    fp = footprint(tm, tf)
    vmem_limit = int(min(budget, max(32 * 2**20, fp + (8 << 20))))

    kernel = functools.partial(_ffn_kernel, eps=eps, matmul_dtype=matmul_dtype,
                               inv_d_model=1.0 / d_model)

    out = pl.pallas_call(
        kernel,
        out_shape=jax.ShapeDtypeStruct((n_pad, d_model), x.dtype),
        grid_spec=pltpu.PrefetchScalarGridSpec(
            num_scalar_prefetch=0,
            grid=grid,
            in_specs=[
                pl.BlockSpec((tm, d_model), lambda i, j: (i, 0)),   # x
                pl.BlockSpec((d_model, tf), lambda i, j: (0, j)),   # w1 (pre-cast)
                pl.BlockSpec((1, tf), lambda i, j: (0, j)),         # b1
                pl.BlockSpec((tf, d_model), lambda i, j: (j, 0)),   # w2 (pre-cast)
                pl.BlockSpec((1, d_model), lambda i, j: (0, 0)),    # b2
                pl.BlockSpec((1, d_model), lambda i, j: (0, 0)),    # gamma
                pl.BlockSpec((1, d_model), lambda i, j: (0, 0)),    # beta
            ],
            out_specs=pl.BlockSpec((tm, d_model), lambda i, j: (i, 0)),
            scratch_shapes=[pltpu.VMEM((tm, d_model), jnp.float32)],
        ),
        compiler_params=pltpu.CompilerParams(
            dimension_semantics=("parallel", "arbitrary"),
            vmem_limit_bytes=vmem_limit,
        ),
    )(x2, w1m, b1_2, w2m, b2_2, gamma_2, beta_2)

    if n_pad != n:
        out = out[:n]
    return out.reshape(orig_shape)


def _reference(x, w1, b1, w2, b2, gamma, beta, eps=1e-5):
    h = jnp.maximum(x @ w1 + b1, 0.0)
    y = h @ w2 + b2
    r = x + y
    mean = jnp.mean(r, axis=-1, keepdims=True)
    var = jnp.mean((r - mean) ** 2, axis=-1, keepdims=True)
    return (r - mean) / jnp.sqrt(var + eps) * gamma + beta


def _make_params(key, d_model, d_ff):
    k1, k2, k3, k4, kg, kb = jax.random.split(key, 6)
    w1 = jax.random.normal(k1, (d_model, d_ff), jnp.float32) / jnp.sqrt(
        jnp.float32(d_model))
    b1 = 0.1 * jax.random.normal(k2, (d_ff,), jnp.float32)
    w2 = jax.random.normal(k3, (d_ff, d_model), jnp.float32) / jnp.sqrt(
        jnp.float32(d_ff))
    b2 = 0.1 * jax.random.normal(k4, (d_model,), jnp.float32)
    gamma = 1.0 + 0.1 * jax.random.normal(kg, (d_model,), jnp.float32)
    beta = 0.1 * jax.random.normal(kb, (d_model,), jnp.float32)
    return w1, b1, w2, b2, gamma, beta


if __name__ == "__main__":
    key = jax.random.PRNGKey(0)
    kx1, kp1, kx2, kp2 = jax.random.split(key, 4)

    # Config 1: batch=2, seq=8, d_model=32, d_ff=128 (no padding needed).
    batch, seq, d_model, d_ff = 2, 8, 32, 128
    x = jax.random.normal(kx1, (batch, seq, d_model), jnp.float32)
    w1, b1, w2, b2, gamma, beta = _make_params(kp1, d_model, d_ff)
    ref = _reference(x, w1, b1, w2, b2, gamma, beta)

    # Default perf path: bf16 MXU operands, f32 accumulation (loose check).
    out_bf16 = feed_forward_network(x, w1, b1, w2, b2, gamma, beta)
    jax.block_until_ready(out_bf16)
    assert jnp.allclose(out_bf16, ref, atol=7e-2, rtol=7e-2), "bf16 path mismatch"

    # f32 operand path (multi-pass MXU): tighter check.
    out_f32 = feed_forward_network(x, w1, b1, w2, b2, gamma, beta,
                                   matmul_dtype=jnp.float32)
    jax.block_until_ready(out_f32)
    assert jnp.allclose(out_f32, ref, atol=2e-3, rtol=2e-3), "f32 path mismatch"

    # Config 2: ragged shapes exercising row padding and d_ff padding.
    batch2, seq2, d_model2, d_ff2 = 1, 5, 32, 200
    x2 = jax.random.normal(kx2, (batch2, seq2, d_model2), jnp.float32)
    p2 = _make_params(kp2, d_model2, d_ff2)
    ref2 = _reference(x2, *p2)
    out2 = feed_forward_network(x2, *p2)
    jax.block_until_ready(out2)
    assert jnp.allclose(out2, ref2, atol=7e-2, rtol=7e-2), "padded path mismatch"

    print("KERNEL_OK")
</pallas_src>

<mosaic_0001>
module attributes {stable_mosaic.version = 11 : i64} {
  func.func @_ffn_kernel(%arg0: i32, %arg1: i32, %arg2: memref<16x32xf32, #tpu.memory_space<vmem>>, %arg3: memref<32x128xbf16, #tpu.memory_space<vmem>>, %arg4: memref<1x128xf32, #tpu.memory_space<vmem>>, %arg5: memref<128x32xbf16, #tpu.memory_space<vmem>>, %arg6: memref<1x32xf32, #tpu.memory_space<vmem>>, %arg7: memref<1x32xf32, #tpu.memory_space<vmem>>, %arg8: memref<1x32xf32, #tpu.memory_space<vmem>>, %arg9: memref<16x32xf32, #tpu.memory_space<vmem>>, %arg10: memref<16x32xf32, #tpu.memory_space<vmem>>) attributes {dimension_semantics = [#tpu.dimension_semantics<parallel>, #tpu.dimension_semantics<arbitrary>], iteration_bounds = array<i64: 1, 1>, scalar_prefetch = 0 : i64, scratch_operands = 1 : i64, tpu.core_type = #tpu.core_type<tc>, window_params = [{transform_indices = @transform_0, window_bounds = array<i64: 16, 32>}, {transform_indices = @transform_1, window_bounds = array<i64: 32, 128>}, {transform_indices = @transform_2, window_bounds = array<i64: 1, 128>}, {transform_indices = @transform_3, window_bounds = array<i64: 128, 32>}, {pipeline_mode = #tpu.pipeline_mode<synchronous>, transform_indices = @transform_4, window_bounds = array<i64: 1, 32>}, {pipeline_mode = #tpu.pipeline_mode<synchronous>, transform_indices = @transform_5, window_bounds = array<i64: 1, 32>}, {pipeline_mode = #tpu.pipeline_mode<synchronous>, transform_indices = @transform_6, window_bounds = array<i64: 1, 32>}, {transform_indices = @transform_7, window_bounds = array<i64: 16, 32>}]} {
    %c0_i32 = arith.constant 0 : i32
    %0 = arith.cmpi eq, %arg1, %c0_i32 : i32
    %1 = arith.extui %0 : i1 to i32
    %c0_i32_0 = arith.constant 0 : i32
    %2 = arith.cmpi ne, %1, %c0_i32_0 : i32
    scf.if %2 {
      %c0_16 = arith.constant 0 : index
      %c0_17 = arith.constant 0 : index
      %21 = vector.load %arg6[%c0_16, %c0_17] : memref<1x32xf32, #tpu.memory_space<vmem>>, vector<1x32xf32>
      %22 = vector.shape_cast %21 : vector<1x32xf32> to vector<1x32xf32>
      %23 = vector.broadcast %22 : vector<1x32xf32> to vector<16x32xf32>
      %c0_18 = arith.constant 0 : index
      %c0_19 = arith.constant 0 : index
      %24 = vector.load %arg10[%c0_18, %c0_19] : memref<16x32xf32, #tpu.memory_space<vmem>>, vector<16x32xf32>
      tpu.vector_store %arg10[%c0_18, %c0_19], %23 {strides = array<i32>} : memref<16x32xf32, #tpu.memory_space<vmem>>, vector<16x32xf32>,
    } else {
    }
    %c0 = arith.constant 0 : index
    %c0_1 = arith.constant 0 : index
    %3 = vector.load %arg2[%c0, %c0_1] : memref<16x32xf32, #tpu.memory_space<vmem>>, vector<16x32xf32>
    %4 = arith.truncf %3 : vector<16x32xf32> to vector<16x32xbf16>
    %c0_2 = arith.constant 0 : index
    %c0_3 = arith.constant 0 : index
    %5 = vector.load %arg3[%c0_2, %c0_3] : memref<32x128xbf16, #tpu.memory_space<vmem>>, vector<32x128xbf16>
    %cst = arith.constant dense<0.000000e+00> : vector<16x128xf32>
    %6 = tpu.matmul %4, %5, %cst {dimension_numbers = #tpu.dot_dimension_numbers<[1], [0], [0], [1], [0, 0, 1, 1], [], []>} : vector<16x32xbf16>, vector<32x128xbf16>, vector<16x128xf32> -> vector<16x128xf32>
    %c0_4 = arith.constant 0 : index
    %c0_5 = arith.constant 0 : index
    %7 = vector.load %arg4[%c0_4, %c0_5] : memref<1x128xf32, #tpu.memory_space<vmem>>, vector<1x128xf32>
    %8 = vector.broadcast %7 : vector<1x128xf32> to vector<16x128xf32>
    %9 = arith.addf %6, %8 : vector<16x128xf32>
    %cst_6 = arith.constant 0.000000e+00 : f32
    %10 = vector.broadcast %cst_6 : f32 to vector<16x128xf32>
    %11 = arith.maximumf %9, %10 : vector<16x128xf32>
    %c0_7 = arith.constant 0 : index
    %c0_8 = arith.constant 0 : index
    %12 = vector.load %arg10[%c0_7, %c0_8] : memref<16x32xf32, #tpu.memory_space<vmem>>, vector<16x32xf32>
    %13 = arith.truncf %11 : vector<16x128xf32> to vector<16x128xbf16>
    %c0_9 = arith.constant 0 : index
    %c0_10 = arith.constant 0 : index
    %14 = vector.load %arg5[%c0_9, %c0_10] : memref<128x32xbf16, #tpu.memory_space<vmem>>, vector<128x32xbf16>
    %cst_11 = arith.constant dense<0.000000e+00> : vector<16x32xf32>
    %15 = tpu.matmul %13, %14, %cst_11 {dimension_numbers = #tpu.dot_dimension_numbers<[1], [0], [0], [1], [0, 0, 1, 1], [], []>} : vector<16x128xbf16>, vector<128x32xbf16>, vector<16x32xf32> -> vector<16x32xf32>
    %16 = arith.addf %12, %15 : vector<16x32xf32>
    %c0_12 = arith.constant 0 : index
    %c0_13 = arith.constant 0 : index
    %17 = vector.load %arg10[%c0_12, %c0_13] : memref<16x32xf32, #tpu.memory_space<vmem>>, vector<16x32xf32>
    tpu.vector_store %arg10[%c0_12, %c0_13], %16 {strides = array<i32>} : memref<16x32xf32, #tpu.memory_space<vmem>>, vector<16x32xf32>,
    %c0_i32_14 = arith.constant 0 : i32
    %18 = arith.cmpi eq, %arg1, %c0_i32_14 : i32
    %19 = arith.extui %18 : i1 to i32
    %c0_i32_15 = arith.constant 0 : i32
    %20 = arith.cmpi ne, %19, %c0_i32_15 : i32
    scf.if %20 {
      %c0_16 = arith.constant 0 : index
      %c0_17 = arith.constant 0 : index
      %21 = vector.load %arg10[%c0_16, %c0_17] : memref<16x32xf32, #tpu.memory_space<vmem>>, vector<16x32xf32>
      %22 = arith.addf %3, %21 : vector<16x32xf32>
      %cst_18 = arith.constant dense<0.000000e+00> : vector<16xf32>
      %23 = vector.multi_reduction <add>, %22, %cst_18 [1] : vector<16x32xf32> to vector<16xf32>
      %24 = vector.shape_cast %23 : vector<16xf32> to vector<16x1xf32>
      %25 = arith.mulf %22, %22 : vector<16x32xf32>
      %cst_19 = arith.constant dense<0.000000e+00> : vector<16xf32>
      %26 = vector.multi_reduction <add>, %25, %cst_19 [1] : vector<16x32xf32> to vector<16xf32>
      %27 = vector.shape_cast %26 : vector<16xf32> to vector<16x1xf32>
      %cst_20 = arith.constant 3.125000e-02 : f32
      %28 = vector.broadcast %cst_20 : f32 to vector<16x1xf32>
      %29 = arith.mulf %24, %28 : vector<16x1xf32>
      %cst_21 = arith.constant 3.125000e-02 : f32
      %30 = vector.broadcast %cst_21 : f32 to vector<16x1xf32>
      %31 = arith.mulf %27, %30 : vector<16x1xf32>
      %32 = arith.mulf %29, %29 : vector<16x1xf32>
      %33 = arith.subf %31, %32 : vector<16x1xf32>
      %cst_22 = arith.constant 0.000000e+00 : f32
      %34 = vector.broadcast %cst_22 : f32 to vector<16x1xf32>
      %35 = arith.maximumf %33, %34 : vector<16x1xf32>
      %cst_23 = arith.constant 9.99999974E-6 : f32
      %36 = vector.broadcast %cst_23 : f32 to vector<16x1xf32>
      %37 = arith.addf %35, %36 : vector<16x1xf32>
      %38 = math.rsqrt %37 : vector<16x1xf32>
      %39 = vector.broadcast %29 : vector<16x1xf32> to vector<16x32xf32>
      %40 = arith.subf %22, %39 : vector<16x32xf32>
      %41 = vector.broadcast %38 : vector<16x1xf32> to vector<16x32xf32>
      %42 = arith.mulf %40, %41 : vector<16x32xf32>
      %c0_24 = arith.constant 0 : index
      %c0_25 = arith.constant 0 : index
      %43 = vector.load %arg7[%c0_24, %c0_25] : memref<1x32xf32, #tpu.memory_space<vmem>>, vector<1x32xf32>
      %44 = vector.broadcast %43 : vector<1x32xf32> to vector<16x32xf32>
      %45 = arith.mulf %42, %44 : vector<16x32xf32>
      %c0_26 = arith.constant 0 : index
      %c0_27 = arith.constant 0 : index
      %46 = vector.load %arg8[%c0_26, %c0_27] : memref<1x32xf32, #tpu.memory_space<vmem>>, vector<1x32xf32>
      %47 = vector.broadcast %46 : vector<1x32xf32> to vector<16x32xf32>
      %48 = arith.addf %45, %47 : vector<16x32xf32>
      %c0_28 = arith.constant 0 : index
      %c0_29 = arith.constant 0 : index
      %49 = vector.load %arg9[%c0_28, %c0_29] : memref<16x32xf32, #tpu.memory_space<vmem>>, vector<16x32xf32>
      tpu.vector_store %arg9[%c0_28, %c0_29], %48 {strides = array<i32>} : memref<16x32xf32, #tpu.memory_space<vmem>>, vector<16x32xf32>,
    } else {
    }
    return
  }
  func.func @transform_0(%arg0: i32, %arg1: i32) -> (i32, i32) {
    %c0_i32 = arith.constant 0 : i32
    %c0_i32_0 = arith.constant 0 : i32
    return %arg0, %c0_i32 : i32, i32
  }
  func.func @transform_1(%arg0: i32, %arg1: i32) -> (i32, i32) {
    %c0_i32 = arith.constant 0 : i32
    %c0_i32_0 = arith.constant 0 : i32
    return %c0_i32, %arg1 : i32, i32
  }
  func.func @transform_2(%arg0: i32, %arg1: i32) -> (i32, i32) {
    %c0_i32 = arith.constant 0 : i32
    %c0_i32_0 = arith.constant 0 : i32
    return %c0_i32, %arg1 : i32, i32
  }
  func.func @transform_3(%arg0: i32, %arg1: i32) -> (i32, i32) {
    %c0_i32 = arith.constant 0 : i32
    %c0_i32_0 = arith.constant 0 : i32
    return %arg1, %c0_i32 : i32, i32
  }
  func.func @transform_4(%arg0: i32, %arg1: i32) -> (i32, i32) {
    %c0_i32 = arith.constant 0 : i32
    %c0_i32_0 = arith.constant 0 : i32
    %c0_i32_1 = arith.constant 0 : i32
    return %c0_i32, %c0_i32_0 : i32, i32
  }
  func.func @transform_5(%arg0: i32, %arg1: i32) -> (i32, i32) {
    %c0_i32 = arith.constant 0 : i32
    %c0_i32_0 = arith.constant 0 : i32
    %c0_i32_1 = arith.constant 0 : i32
    return %c0_i32, %c0_i32_0 : i32, i32
  }
  func.func @transform_6(%arg0: i32, %arg1: i32) -> (i32, i32) {
    %c0_i32 = arith.constant 0 : i32
    %c0_i32_0 = arith.constant 0 : i32
    %c0_i32_1 = arith.constant 0 : i32
    return %c0_i32, %c0_i32_0 : i32, i32
  }
  func.func @transform_7(%arg0: i32, %arg1: i32) -> (i32, i32) {
    %c0_i32 = arith.constant 0 : i32
    %c0_i32_0 = arith.constant 0 : i32
    return %arg0, %c0_i32 : i32, i32
  }
}

</mosaic_0001>

<llo_original>
// kernel: tpu_custom_call.1
$region0: #{tpu_custom_call.1}
  #allocation0 [shape = 'u32[]', space=smem, size = 0x4, offset = 0x4, fixed_abs, tag = 'smem constant byte address 0x4 - core index']
  #allocation1 [shape = 'u32[144,128]{1,0:T(1,128)}', space=vmem, size = 0x12000, scoped, tag = 'internal scratch']
  #allocation2 [shape = 'f32[16,32]{1,0:T(8,128)}', space=vmem, size = 0x2000, scoped, tag = 'scratch operand']
  %s0 = inlined_call_operand.vmem [shape: f32[16,32], index: 0, kind: input, shape index: {}]
  %s1 = inlined_call_operand.vmem [shape: bf16[32,128], index: 1, kind: input, shape index: {}]
  %s2 = inlined_call_operand.vmem [shape: f32[1,128], index: 2, kind: input, shape index: {}]
  %s3 = inlined_call_operand.vmem [shape: bf16[128,32], index: 3, kind: input, shape index: {}]
  %s4 = inlined_call_operand.vmem [shape: f32[1,32], index: 4, kind: input, shape index: {}]
  %s5 = inlined_call_operand.vmem [shape: f32[1,32], index: 5, kind: input, shape index: {}]
  %s6 = inlined_call_operand.vmem [shape: f32[1,32], index: 6, kind: input, shape index: {}]
  %s7 = inlined_call_operand.hbm [shape: f32[16,32], index: 7, kind: output, shape index: {}]
  %s8 = sld [smem:[#allocation0]]
  $region46: #{tpu_custom_call.1} parent=0
    _
  %s10 = ssub.s32 1, %s8
  %s11 = scalar_select 0, %s10, %s8
  $region1: #{tpu_custom_call.1} parent=0
    #allocation3 [shape = 'u8[8192]{0}', space=vmem, size = 0x2000, scoped, tag = 'output window, operand 0, single buffered']
    #allocation4 [shape = 's32[1]{0}', space=sflag, size = 0x4, scoped, tag = 'scoped memory for tpu_custom_call.1']
    %12 = vsyncpa [#allocation4], 0
    // Predicated region
    $region2: #{tpu_custom_call.1} parent=1 // pred_check
      _
    $region3: #{tpu_custom_call.1} parent=1 // pred_check_branch
      %14 = sbr.rel (0) target = $region5
    $region4: #{tpu_custom_call.1} parent=1 // pred_region
      _
    $region5: #{tpu_custom_call.1} parent=1 // pred_fallthru
      _
    // Predicated region
    $region6: #{tpu_custom_call.1} parent=1 // pred_check
      _
    $region7: #{tpu_custom_call.1} parent=1 // pred_check_branch
      %16 = sbr.rel (0) target = $region9
    $region8: #{tpu_custom_call.1} parent=1 // pred_region
      _
    $region9: #{tpu_custom_call.1} parent=1 // pred_fallthru
      _
    // Predicated region
    $region10: #{tpu_custom_call.1} parent=1 // pred_check
      _
    $region11: #{tpu_custom_call.1} parent=1 // pred_check_branch
      %18 = sbr.rel (0) target = $region13
    $region12: #{tpu_custom_call.1} parent=1 // pred_region
      _
    $region13: #{tpu_custom_call.1} parent=1 // pred_fallthru
      _
    // Predicated region
    $region14: #{tpu_custom_call.1} parent=1 // pred_check
      _
    $region15: #{tpu_custom_call.1} parent=1 // pred_check_branch
      %20 = sbr.rel (0) target = $region17
    $region16: #{tpu_custom_call.1} parent=1 // pred_region
      _
    $region17: #{tpu_custom_call.1} parent=1 // pred_fallthru
      _
    // Predicated region
    $region18: #{tpu_custom_call.1} parent=1 // pred_check
      _
    $region19: #{tpu_custom_call.1} parent=1 // pred_check_branch
      %22 = sbr.rel (0) target = $region21
    $region20: #{tpu_custom_call.1} parent=1 // pred_region
      _
    $region21: #{tpu_custom_call.1} parent=1 // pred_fallthru
      _
    // Predicated region
    $region22: #{tpu_custom_call.1} parent=1 // pred_check
      _
    $region23: #{tpu_custom_call.1} parent=1 // pred_check_branch
      %24 = sbr.rel (0) target = $region25
    $region24: #{tpu_custom_call.1} parent=1 // pred_region
      _
    $region25: #{tpu_custom_call.1} parent=1 // pred_fallthru
      _
    // Predicated region
    $region26: #{tpu_custom_call.1} parent=1 // pred_check
      _
    $region27: #{tpu_custom_call.1} parent=1 // pred_check_branch
      %26 = sbr.rel (0) target = $region29
    $region28: #{tpu_custom_call.1} parent=1 // pred_region
      _
    $region29: #{tpu_custom_call.1} parent=1 // pred_fallthru
      _
    %p28 = scmp.eq.s32.totalorder 0, 0
    // Predicated region
    $region30: #{tpu_custom_call.1} parent=1 // pred_check
      %p29 = pneg %p28
    $region31: #{tpu_custom_call.1} parent=1 // pred_check_branch
      %31 = sbr.rel (%p29) target = $region33
    $region32: #{tpu_custom_call.1} parent=1 // pred_region
      %v32 = vld [vmem:[%s4] sm:$0x1]
      %v34 = vlaneseq
      %v35 = vshrl.u32 %v34, 7
      %v36 = vsub.s32 0, %v35
      %v37 = vrot.slane %v32, %v36
      %vm39 = vcmask 261120
      %40 = vst.msk [vmem:[#allocation2] sm:$0xff] %vm39, %v37
      %41 = vst.msk [vmem:[#allocation2 + $0x8] sm:$0xff] %vm39, %v37
    $region33: #{tpu_custom_call.1} parent=1 // pred_fallthru
      _
    %v42 = vld [vmem:[%s0] sm:$0xff]
    %v43 = vld [vmem:[%s0 + $0x8] sm:$0xff]
    %v44 = vpack.c.bf16 %v43, %v42
    %v45 = vld [vmem:[%s1] sm:$0xf]
    %v46 = vld [vmem:[%s1 + $0x4] sm:$0xf]
    %v47 = vld [vmem:[%s1 + $0x8] sm:$0xf]
    %v48 = vld [vmem:[%s1 + $0xc] sm:$0xf]
    %v49 = vld [vmem:[%s2] sm:$0x1]
    %v51 = vlaneseq
    %v52 = vshrl.u32 %v51, 7
    %v53 = vsub.s32 0, %v52
    %v54 = vrot.slane %v49, %v53
    %v60 = vunpack.c.l.b16 %v45
    %v61 = vunpack.c.l.b16 %v46
    %v62 = vunpack.c.l.b16 %v47
    %v63 = vunpack.c.l.b16 %v48
    %v64 = vpack.c.b16 %v61, %v60
    %v65 = vpack.c.b16 %v63, %v62
    %vm68 = vcmask 261120
    %v70 = vsel %vm68, %v44, 0
    %72 = vmatprep.subr.bf16.mxu0 0
    %73 = vmatpush1.bf16.msra.mxu0 0
    %74 = vmatprep.subr.bf16.mxu0 0
    %75 = vmatpush1.bf16.msra.mxu0 0
    %76 = vmatprep.subr.bf16.mxu0 0
    %77 = vmatpush1.bf16.msra.mxu0 0
    %78 = vmatprep.subr.bf16.mxu0 0
    %79 = vmatpush1.bf16.msra.mxu0 0
    %80 = vmatprep.subr.bf16.mxu0 0
    %81 = vmatpush1.bf16.msra.mxu0 0
    %82 = vmatprep.subr.bf16.mxu0 0
    %83 = vmatpush1.bf16.msra.mxu0 0
    %84 = vmatprep.subr.bf16.mxu0 0
    %85 = vmatpush1.bf16.msra.mxu0 %v65
    %86 = vmatprep.subr.bf16.mxu0 0
    %87 = vmatpush1.bf16.msra.mxu0 %v64
    %88 = vmatprep.subr.bf16.mxu0 0
    %89 = vmatpush2.bf16.msra.mxu0 0
    %90 = vmatprep.subr.bf16.mxu0 0
    %91 = vmatpush2.bf16.msra.mxu0 0
    %92 = vmatprep.subr.bf16.mxu0 0
    %93 = vmatpush2.bf16.msra.mxu0 0
    %94 = vmatprep.subr.bf16.mxu0 0
    %95 = vmatpush2.bf16.msra.mxu0 0
    %96 = vmatprep.subr.bf16.mxu0 0
    %97 = vmatpush2.bf16.msra.mxu0 0
    %98 = vmatprep.subr.bf16.mxu0 0
    %99 = vmatpush2.bf16.msra.mxu0 0
    %100 = vmatprep.subr.bf16.mxu0 0
    %101 = vmatpush2.bf16.msra.mxu0 0
    %102 = vmatprep.subr.bf16.mxu0 0
    %103 = vmatpush2.bf16.msra.mxu0 0
    %104 = vmatprep.mubr.bf16.mxu0 0
    %105 = vmatmul.mubr.bf16.gmra.mxu0 %v70
    %v106 = vpop.f32.mrf.mxu0
    %v107 = vadd.f32 %v54, %v106
    %v108 = vpop.f32.mrf.mxu0
    %v109 = vpop.f32.mrf.mxu0
    %v110 = vadd.f32 %v54, %v109
    %v111 = vpop.f32.mrf.mxu0
    %112 = vdwg.mxu0
    %v113 = vmax.f32 %v107, 0.0
    %v114 = vmax.f32 %v110, 0.0
    %v115 = vld [vmem:[#allocation2] sm:$0xff]
    %v116 = vld [vmem:[#allocation2 + $0x8] sm:$0xff]
    %v117 = vpack.c.bf16 %v114, %v113
    %v118 = vld [vmem:[%s3] sm:$0xf]
    %v119 = vld [vmem:[%s3 + $0x4] sm:$0xf]
    %v120 = vld [vmem:[%s3 + $0x8] sm:$0xf]
    %v121 = vld [vmem:[%s3 + $0xc] sm:$0xf]
    %v122 = vld [vmem:[%s3 + $0x10] sm:$0xf]
    %v123 = vld [vmem:[%s3 + $0x14] sm:$0xf]
    %v124 = vld [vmem:[%s3 + $0x18] sm:$0xf]
    %v125 = vld [vmem:[%s3 + $0x1c] sm:$0xf]
    %v126 = vld [vmem:[%s3 + $0x20] sm:$0xf]
    %v127 = vld [vmem:[%s3 + $0x24] sm:$0xf]
    %v128 = vld [vmem:[%s3 + $0x28] sm:$0xf]
    %v129 = vld [vmem:[%s3 + $0x2c] sm:$0xf]
    %v130 = vld [vmem:[%s3 + $0x30] sm:$0xf]
    %v131 = vld [vmem:[%s3 + $0x34] sm:$0xf]
    %v132 = vld [vmem:[%s3 + $0x38] sm:$0xf]
    %v133 = vld [vmem:[%s3 + $0x3c] sm:$0xf]
    %v150 = vunpack.c.l.b16 %v118
    %v151 = vunpack.c.l.b16 %v119
    %v152 = vunpack.c.l.b16 %v120
    %v153 = vunpack.c.l.b16 %v121
    %v154 = vunpack.c.l.b16 %v122
    %v155 = vunpack.c.l.b16 %v123
    %v156 = vunpack.c.l.b16 %v124
    %v157 = vunpack.c.l.b16 %v125
    %v158 = vunpack.c.l.b16 %v126
    %v159 = vunpack.c.l.b16 %v127
    %v160 = vunpack.c.l.b16 %v128
    %v161 = vunpack.c.l.b16 %v129
    %v162 = vunpack.c.l.b16 %v130
    %v163 = vunpack.c.l.b16 %v131
    %v164 = vunpack.c.l.b16 %v132
    %v165 = vunpack.c.l.b16 %v133
    %v166 = vpack.c.b16 %v151, %v150
    %v167 = vpack.c.b16 %v153, %v152
    %v168 = vpack.c.b16 %v155, %v154
    %v169 = vpack.c.b16 %v157, %v156
    %v170 = vpack.c.b16 %v159, %v158
    %v171 = vpack.c.b16 %v161, %v160
    %v172 = vpack.c.b16 %v163, %v162
    %v173 = vpack.c.b16 %v165, %v164
    %182 = vmatprep.subr.bf16.mxu0 0
    %183 = vmatpush1.bf16.msra.mxu0 %v173
    %184 = vmatprep.subr.bf16.mxu0 0
    %185 = vmatpush1.bf16.msra.mxu0 %v172
    %186 = vmatprep.subr.bf16.mxu0 0
    %187 = vmatpush1.bf16.msra.mxu0 %v171
    %188 = vmatprep.subr.bf16.mxu0 0
    %189 = vmatpush1.bf16.msra.mxu0 %v170
    %190 = vmatprep.subr.bf16.mxu0 0
    %191 = vmatpush1.bf16.msra.mxu0 %v169
    %192 = vmatprep.subr.bf16.mxu0 0
    %193 = vmatpush1.bf16.msra.mxu0 %v168
    %194 = vmatprep.subr.bf16.mxu0 0
    %195 = vmatpush1.bf16.msra.mxu0 %v167
    %196 = vmatprep.subr.bf16.mxu0 0
    %197 = vmatpush1.bf16.msra.mxu0 %v166
    %198 = vmatprep.subr.bf16.mxu0 0
    %199 = vmatpush2.bf16.msra.mxu0 0
    %200 = vmatprep.subr.bf16.mxu0 0
    %201 = vmatpush2.bf16.msra.mxu0 0
    %202 = vmatprep.subr.bf16.mxu0 0
    %203 = vmatpush2.bf16.msra.mxu0 0
    %204 = vmatprep.subr.bf16.mxu0 0
    %205 = vmatpush2.bf16.msra.mxu0 0
    %206 = vmatprep.subr.bf16.mxu0 0
    %207 = vmatpush2.bf16.msra.mxu0 0
    %208 = vmatprep.subr.bf16.mxu0 0
    %209 = vmatpush2.bf16.msra.mxu0 0
    %210 = vmatprep.subr.bf16.mxu0 0
    %211 = vmatpush2.bf16.msra.mxu0 0
    %212 = vmatprep.subr.bf16.mxu0 0
    %213 = vmatpush2.bf16.msra.mxu0 0
    %214 = vmatprep.mubr.bf16.mxu0 0
    %215 = vmatmul.mubr.bf16.gmra.mxu0 %v117
    %v216 = vpop.f32.mrf.mxu0
    %v217 = vadd.f32 0.0, %v216
    %v218 = vpop.f32.mrf.mxu0
    %v219 = vpop.f32.mrf.mxu0
    %v220 = vadd.f32 0.0, %v219
    %v221 = vpop.f32.mrf.mxu0
    %222 = vdwg.mxu0
    %v223 = vadd.f32 %v115, %v217
    %v224 = vadd.f32 %v116, %v220
    %225 = vst.msk [vmem:[#allocation2] sm:$0xff] %vm68, %v223
    %226 = vst.msk [vmem:[#allocation2 + $0x8] sm:$0xff] %vm68, %v224
    // Predicated region
    $region34: #{tpu_custom_call.1} parent=1 // pred_check
      %p227 = pneg %p28
    $region35: #{tpu_custom_call.1} parent=1 // pred_check_branch
      %229 = sbr.rel (%p227) target = $region37
    $region36: #{tpu_custom_call.1} parent=1 // pred_region
      %v230 = vld [vmem:[#allocation2] sm:$0xff]
      %v231 = vld [vmem:[#allocation2 + $0x8] sm:$0xff]
      %v232 = vadd.f32 %v42, %v230
      %v233 = vadd.f32 %v43, %v231
      %v234 = vsel %vm68, %v232, 0.0
      %235 = vadd.xlane.f32.xlu0 %v234
      %v236 = vpop.xlane.xlu0 %235
      %v237 = vsel %vm68, %v233, 0.0
      %238 = vadd.xlane.f32.xlu0 %v237
      %v239 = vpop.xlane.xlu0 %238
      %v240 = vmul.f32 %v232, %v232
      %v241 = vmul.f32 %v233, %v233
      %v242 = vsel %vm68, %v240, 0.0
      %243 = vadd.xlane.f32.xlu0 %v242
      %v244 = vpop.xlane.xlu0 %243
      %v245 = vsel %vm68, %v241, 0.0
      %246 = vadd.xlane.f32.xlu0 %v245
      %v247 = vpop.xlane.xlu0 %246
      %v248 = vmul.f32 %v236, 0.03125
      %v249 = vmul.f32 %v239, 0.03125
      %v250 = vmul.f32 %v244, 0.03125
      %v251 = vmul.f32 %v247, 0.03125
      %v252 = vmul.f32 %v248, %v248
      %v253 = vmul.f32 %v249, %v249
      %v254 = vsub.f32 %v250, %v252
      %v255 = vsub.f32 %v251, %v253
      %v256 = vmax.f32 %v254, 0.0
      %v257 = vmax.f32 %v255, 0.0
      %v258 = vadd.f32 %v256, 1e-05
      %v259 = vadd.f32 %v257, 1e-05
      %v260 = vrsqrt.pop %v258
      %v261 = vrsqrt.pop %v259
      %v262 = vsub.f32 %v232, %v248
      %v263 = vsub.f32 %v233, %v249
      %v264 = vmul.f32 %v262, %v260
      %v265 = vmul.f32 %v263, %v261
      %v266 = vld [vmem:[%s5] sm:$0x1]
      %v268 = vlaneseq
      %v269 = vshrl.u32 %v268, 7
      %v270 = vsub.s32 0, %v269
      %v271 = vrot.slane %v266, %v270
      %v273 = vmul.f32 %v264, %v271
      %v274 = vmul.f32 %v265, %v271
      %v275 = vld [vmem:[%s6] sm:$0x1]
      %v277 = vlaneseq
      %v278 = vshrl.u32 %v277, 7
      %v279 = vsub.s32 0, %v278
      %v280 = vrot.slane %v275, %v279
      %v282 = vadd.f32 %v273, %v280
      %v283 = vadd.f32 %v274, %v280
      %284 = vst.msk [vmem:[#allocation3] sm:$0xff] %vm68, %v282
      %285 = vst.msk [vmem:[#allocation3 + $0x8] sm:$0xff] %vm68, %v283
    $region37: #{tpu_custom_call.1} parent=1 // pred_fallthru
      _
    // Predicated region
    $region38: #{tpu_custom_call.1} parent=1 // pred_check
      _
    $region39: #{tpu_custom_call.1} parent=1 // pred_check_branch
      %287 = sbr.rel (0) target = $region41
    $region40: #{tpu_custom_call.1} parent=1 // pred_region
      %s289 = ssub.s32 256, 256
      %290 = vsyncadd [#allocation4], %s289
      %s291 = sshll.u32 [#allocation3], 4
      %s292 = int_to_ptr.vmem [resolvable:$true] %s291
      %297 = dma.vmem_to_hbm [thread:$0]  %s292, 256, %s7, [#allocation4], 128, 128, 8
    $region41: #{tpu_custom_call.1} parent=1 // pred_fallthru
      _
    // Predicated region
    $region42: #{tpu_custom_call.1} parent=1 // pred_check
      _
    $region43: #{tpu_custom_call.1} parent=1 // pred_check_branch
      %299 = sbr.rel (0) target = $region45
    $region44: #{tpu_custom_call.1} parent=1 // pred_region
      %300 = dma.done [#allocation4], 256
    $region45: #{tpu_custom_call.1} parent=1 // pred_fallthru
      _
    %301 = vsyncpa [#allocation4], 1

</llo_original>
